<compile_context>
chip_gen: v7x
topology: tpu7x:2x2x1
jax: 0.10.0
libtpu: 0.0.40
codegen_flags: <defaults>
</compile_context>

<pallas_src>
import functools
import math

import jax
import jax.numpy as jnp
import numpy as np
from jax.experimental import pallas as pl
from jax.experimental.pallas import tpu as pltpu

NN_LAYERS = [8, 16, 32, 13]
IN_DIM = 15           # [x0,y0,x1,y1,score, lex,ley,rex,rey, nx,ny, lmx,lmy,rmx,rmy]
OUT_DIM = NN_LAYERS[-1]
LEAKY_SLOPE = 0.01    # torch.nn.LeakyReLU default negative_slope

MAX_BATCH_TILE = 16384                 # ~32 MiB double-buffered in+out: safe on v7x's 64 MiB VMEM
VMEM_LIMIT_BYTES = 48 * 1024 * 1024    # > v5e's 16 MiB default scoped limit, < v7x's 64 MiB physical


def _round_up(n, m):
    return ((n + m - 1) // m) * m


def posenet_kernel(x_ref, w0_ref, b0_ref, w1_ref, b1_ref, w2_ref, b2_ref, o_ref):
    x = x_ref[...]                                   # [TB, 15] float32

    # ---- format(): per-lane bbox normalization of the raw 15-lane layout ----
    x0 = x[:, 0:1]
    y0 = x[:, 1:2]
    x1 = x[:, 2:3]
    y1 = x[:, 3:4]
    width = (x1 - x0) + 0.001
    height = (y1 - y0) + 0.001
    cx = (x1 + x0) * 0.5
    cy = (y1 + y0) * 0.5

    col = jax.lax.broadcasted_iota(jnp.int32, x.shape, 1)
    is_x_coord = (col % 2) == 1                      # lanes 5,7,9,11,13 are x coords
    center = jnp.where(is_x_coord, cx, cy)           # [TB, 15]
    scale = jnp.where(is_x_coord, width, height)     # [TB, 15]
    # Exact reciprocal matches the PyTorch divide; approx=True (EUP vrcp) is an
    # optional micro-opt gated on the 1e-4 tolerance -- kernel is mem-bound.
    nlm = (x - center) * pl.reciprocal(scale, approx=False)
    # Lanes 0..4 end up "normalized" garbage but finite; the folded w0 has
    # exactly-zero rows there (asserted in fold_params) so they never reach
    # the MLP.  Nose subtraction and landmark selection live inside w0_eff.

    # ---- MLP: (15->)16 -> 32 -> 13 ----
    h = jnp.dot(nlm, w0_ref[...], preferred_element_type=jnp.float32) + b0_ref[...]
    h = jnp.where(h > 0, h, LEAKY_SLOPE * h)
    h = jnp.dot(h, w1_ref[...], preferred_element_type=jnp.float32) + b1_ref[...]
    h = jnp.where(h > 0, h, LEAKY_SLOPE * h)
    # dropout(p=0.9) is identity at inference time
    y = jnp.dot(h, w2_ref[...], preferred_element_type=jnp.float32) + b2_ref[...]

    # ---- y[:, -1] = tanh(y[:, -1]) * pi, rest passthrough ----
    ocol = jax.lax.broadcasted_iota(jnp.int32, y.shape, 1)
    o_ref[...] = jnp.where(ocol == OUT_DIM - 1, jnp.tanh(y) * math.pi, y)


def fold_params(raw_params):
    """Fold format()'s linear part into w0.  w2/b2 keep their natural shapes."""
    w0, b0, w1, b1, w2, b2 = raw_params
    # Selection/difference matrix on the bbox-normalized raw 15-lane layout:
    #   feat[j] = nlm[src[j]] - nlm[9 (norm. nose x) or 10 (norm. nose y)]
    src = (5, 6, 7, 8, 11, 12, 13, 14)  # lex,ley,rex,rey,lmx,lmy,rmx,rmy
    S = np.zeros((IN_DIM, NN_LAYERS[0]), np.float32)
    for j, lane in enumerate(src):
        S[lane, j] = 1.0
        S[9 if j % 2 == 0 else 10, j] = -1.0
    w0_eff = jnp.asarray(S) @ w0                                         # [15, 16]
    # Dead input lanes 0..4 (bbox + score) must stay exactly zero-weighted:
    # the kernel's bbox "normalization" of those lanes is garbage-but-finite.
    assert not np.any(np.asarray(w0_eff[:5])), \
        "dead lanes 0..4 of folded w0 must be exactly zero"
    return (w0_eff, b0, w1, b1, w2, b2)


@functools.partial(jax.jit, static_argnames=("batch_tile",))
def posenet_forward(x, folded_params, *, batch_tile=8192):
    """x: [B, 15] float32 -> [B, 13] float32 (last column is arc angle)."""
    w0, b0, w1, b1, w2, b2 = folded_params
    B = x.shape[0]

    # Batch tile: multiple of 8 (sublane), big enough to amortize the
    # ~0.35 us per-grid-step overhead, capped for v7x's smaller VMEM.
    tb = max(8, _round_up(min(batch_tile, MAX_BATCH_TILE, _round_up(B, 8)), 8))
    # Prefer >= 2 grid steps on medium/large batches so the "parallel" axis
    # actually feeds both v7x TensorCores (single TC on v5e/v6e: harmless).
    if B > 16 and pl.cdiv(B, tb) < 2:
        tb = max(8, _round_up(pl.cdiv(B, 2), 8))
    grid = pl.cdiv(B, tb)
    # No jnp.pad / no output slicing: Pallas masks the partial last block, so
    # HBM traffic is exactly one read of x and one write of the 13-wide output.

    def resident(shape):
        # constant index_map -> block stays resident in VMEM across grid steps
        return pl.BlockSpec(shape, lambda i: (0, 0))

    return pl.pallas_call(
        posenet_kernel,
        out_shape=jax.ShapeDtypeStruct((B, OUT_DIM), jnp.float32),
        grid=(grid,),
        in_specs=[
            # streamed / double-buffered; pipeline_mode=pl.Buffered(3) is a
            # further knob if profiling shows exposed DMA.
            pl.BlockSpec((tb, IN_DIM), lambda i: (i, 0)),
            resident(w0.shape), resident(b0.shape),
            resident(w1.shape), resident(b1.shape),
            resident(w2.shape), resident(b2.shape),
        ],
        out_specs=pl.BlockSpec((tb, OUT_DIM), lambda i: (i, 0)),
        compiler_params=pltpu.CompilerParams(
            dimension_semantics=("parallel",),       # shards batch tiles across TCs (v7x)
            vmem_limit_bytes=VMEM_LIMIT_BYTES),
    )(x, w0, b0, w1, b1, w2, b2)


def init_params(key):
    """Deterministic synthetic raw weights (shapes match poseNetv3_mt([8,16,32,13]),
    pre-transposed to [in, out])."""
    ks = jax.random.split(key, 6)
    dims = NN_LAYERS
    params = []
    for i in range(3):
        fan_in, fan_out = dims[i], dims[i + 1]
        bound = 1.0 / math.sqrt(fan_in)
        w = jax.random.uniform(ks[2 * i], (fan_in, fan_out), jnp.float32, -bound, bound)
        b = jax.random.uniform(ks[2 * i + 1], (1, fan_out), jnp.float32, -bound, bound)
        params += [w, b]
    return tuple(params)


def reference_forward(x, raw_params):
    """Pure-JAX mirror of the PyTorch forward (eval mode), for verification."""
    w0, b0, w1, b1, w2, b2 = raw_params
    bbox = x[:, :4]
    landmk = x[:, 5:]
    width = (bbox[:, 2] - bbox[:, 0])[:, None] + 0.001
    height = (bbox[:, 3] - bbox[:, 1])[:, None] + 0.001
    cx = ((bbox[:, 2] + bbox[:, 0]) / 2)[:, None]
    cy = ((bbox[:, 3] + bbox[:, 1]) / 2)[:, None]
    even = (landmk[:, ::2] - cx) / width
    odd = (landmk[:, 1::2] - cy) / height
    even = even - even[:, 2:3]
    odd = odd - odd[:, 2:3]
    lm = jnp.stack([even, odd], axis=-1).reshape(x.shape[0], -1)
    feat = jnp.concatenate([lm[:, :4], lm[:, 6:]], axis=1)

    def leaky(v):
        return jnp.where(v > 0, v, LEAKY_SLOPE * v)

    h = leaky(feat @ w0 + b0)
    h = leaky(h @ w1 + b1)
    y = h @ w2 + b2
    last = jnp.tanh(y[:, -1:]) * math.pi
    return jnp.concatenate([y[:, :-1], last], axis=1)


def _make_input(key, batch):
    x = jax.random.uniform(key, (batch, IN_DIM), jnp.float32, 0.0, 1.0)
    # make bbox well-formed: x1 > x0, y1 > y0
    x = x.at[:, 2].set(x[:, 0] + 0.3 + 0.5 * x[:, 2])
    x = x.at[:, 3].set(x[:, 1] + 0.3 + 0.5 * x[:, 3])
    return x


if __name__ == "__main__":
    key = jax.random.PRNGKey(0)
    k_x, k_p = jax.random.split(key)

    raw_params = init_params(k_p)
    folded_params = fold_params(raw_params)

    # --- small single-tile check (B = 8) ---
    x = _make_input(k_x, 8)
    out = jax.block_until_ready(posenet_forward(x, folded_params))
    ref = reference_forward(x, raw_params)
    assert out.shape == (8, OUT_DIM)
    err = float(jnp.max(jnp.abs(out - ref)))
    assert err < 1e-4, f"max abs err = {err}"

    # --- multi-tile, non-multiple batch (B = 30, tile = 8 -> grid of 4,
    #     partial last block masked by Pallas, no wrapper pad/slice) ---
    k_x2, _ = jax.random.split(k_x)
    x2 = _make_input(k_x2, 30)
    out2 = jax.block_until_ready(posenet_forward(x2, folded_params, batch_tile=8))
    ref2 = reference_forward(x2, raw_params)
    assert out2.shape == (30, OUT_DIM)
    err2 = float(jnp.max(jnp.abs(out2 - ref2)))
    assert err2 < 1e-4, f"max abs err (tiled) = {err2}"

    print("KERNEL_OK")
</pallas_src>

<mosaic_0001>
module attributes {stable_mosaic.version = 11 : i64} {
  func.func @posenet_kernel(%arg0: i32, %arg1: memref<8x15xf32, #tpu.memory_space<vmem>>, %arg2: memref<15x16xf32, #tpu.memory_space<vmem>>, %arg3: memref<1x16xf32, #tpu.memory_space<vmem>>, %arg4: memref<16x32xf32, #tpu.memory_space<vmem>>, %arg5: memref<1x32xf32, #tpu.memory_space<vmem>>, %arg6: memref<32x13xf32, #tpu.memory_space<vmem>>, %arg7: memref<1x13xf32, #tpu.memory_space<vmem>>, %arg8: memref<8x13xf32, #tpu.memory_space<vmem>>) attributes {dimension_semantics = [#tpu.dimension_semantics<parallel>], iteration_bounds = array<i64: 1>, scalar_prefetch = 0 : i64, scratch_operands = 0 : i64, tpu.core_type = #tpu.core_type<tc>, window_params = [{transform_indices = @transform_0, window_bounds = array<i64: 8, 15>}, {pipeline_mode = #tpu.pipeline_mode<synchronous>, transform_indices = @transform_1, window_bounds = array<i64: 15, 16>}, {pipeline_mode = #tpu.pipeline_mode<synchronous>, transform_indices = @transform_2, window_bounds = array<i64: 1, 16>}, {pipeline_mode = #tpu.pipeline_mode<synchronous>, transform_indices = @transform_3, window_bounds = array<i64: 16, 32>}, {pipeline_mode = #tpu.pipeline_mode<synchronous>, transform_indices = @transform_4, window_bounds = array<i64: 1, 32>}, {pipeline_mode = #tpu.pipeline_mode<synchronous>, transform_indices = @transform_5, window_bounds = array<i64: 32, 13>}, {pipeline_mode = #tpu.pipeline_mode<synchronous>, transform_indices = @transform_6, window_bounds = array<i64: 1, 13>}, {transform_indices = @transform_7, window_bounds = array<i64: 8, 13>}]} {
    %c0 = arith.constant 0 : index
    %c0_0 = arith.constant 0 : index
    %0 = vector.load %arg1[%c0, %c0_0] : memref<8x15xf32, #tpu.memory_space<vmem>>, vector<8x15xf32>
    %1 = vector.extract_strided_slice %0 {offsets = [0, 0], sizes = [8, 1], strides = [1, 1]} : vector<8x15xf32> to vector<8x1xf32>
    %2 = vector.extract_strided_slice %0 {offsets = [0, 1], sizes = [8, 1], strides = [1, 1]} : vector<8x15xf32> to vector<8x1xf32>
    %3 = vector.extract_strided_slice %0 {offsets = [0, 2], sizes = [8, 1], strides = [1, 1]} : vector<8x15xf32> to vector<8x1xf32>
    %4 = vector.extract_strided_slice %0 {offsets = [0, 3], sizes = [8, 1], strides = [1, 1]} : vector<8x15xf32> to vector<8x1xf32>
    %5 = arith.subf %3, %1 : vector<8x1xf32>
    %cst = arith.constant 1.000000e-03 : f32
    %6 = vector.broadcast %cst : f32 to vector<8x1xf32>
    %7 = arith.addf %5, %6 : vector<8x1xf32>
    %8 = arith.subf %4, %2 : vector<8x1xf32>
    %cst_1 = arith.constant 1.000000e-03 : f32
    %9 = vector.broadcast %cst_1 : f32 to vector<8x1xf32>
    %10 = arith.addf %8, %9 : vector<8x1xf32>
    %11 = arith.addf %3, %1 : vector<8x1xf32>
    %cst_2 = arith.constant 5.000000e-01 : f32
    %12 = vector.broadcast %cst_2 : f32 to vector<8x1xf32>
    %13 = arith.mulf %11, %12 : vector<8x1xf32>
    %14 = arith.addf %4, %2 : vector<8x1xf32>
    %cst_3 = arith.constant 5.000000e-01 : f32
    %15 = vector.broadcast %cst_3 : f32 to vector<8x1xf32>
    %16 = arith.mulf %14, %15 : vector<8x1xf32>
    %17 = tpu.iota {dimensions = array<i32: 1>} : vector<8x15xi32>
    %c2_i32 = arith.constant 2 : i32
    %c0_i32 = arith.constant 0 : i32
    %18 = arith.cmpi eq, %c2_i32, %c0_i32 : i32
    %c1_i32 = arith.constant 1 : i32
    %19 = arith.select %18, %c1_i32, %c2_i32 : i32
    %20 = vector.broadcast %19 : i32 to vector<8x15xi32>
    %21 = arith.remsi %17, %20 : vector<8x15xi32>
    %c0_i32_4 = arith.constant 0 : i32
    %22 = vector.broadcast %c0_i32_4 : i32 to vector<8x15xi32>
    %23 = arith.cmpi ne, %21, %22 : vector<8x15xi32>
    %c0_i32_5 = arith.constant 0 : i32
    %24 = vector.broadcast %c0_i32_5 : i32 to vector<8x15xi32>
    %25 = arith.cmpi slt, %21, %24 : vector<8x15xi32>
    %c0_i32_6 = arith.constant 0 : i32
    %26 = arith.cmpi slt, %19, %c0_i32_6 : i32
    %27 = vector.broadcast %26 : i1 to vector<8x15xi1>
    %28 = vector.broadcast %27 : vector<8x15xi1> to vector<8x15xi1>
    %29 = arith.xori %25, %28 : vector<8x15xi1>
    %30 = arith.andi %29, %23 : vector<8x15xi1>
    %31 = vector.broadcast %19 : i32 to vector<8x15xi32>
    %32 = arith.addi %21, %31 : vector<8x15xi32>
    %33 = arith.select %30, %32, %21 : vector<8x15xi1>, vector<8x15xi32>
    %c1_i32_7 = arith.constant 1 : i32
    %34 = vector.broadcast %c1_i32_7 : i32 to vector<8x15xi32>
    %35 = arith.cmpi eq, %33, %34 : vector<8x15xi32>
    %36 = vector.shape_cast %13 : vector<8x1xf32> to vector<8x1xf32>
    %37 = vector.broadcast %36 : vector<8x1xf32> to vector<8x15xf32>
    %38 = vector.shape_cast %16 : vector<8x1xf32> to vector<8x1xf32>
    %39 = vector.broadcast %38 : vector<8x1xf32> to vector<8x15xf32>
    %40 = arith.select %35, %37, %39 : vector<8x15xi1>, vector<8x15xf32>
    %41 = vector.shape_cast %7 : vector<8x1xf32> to vector<8x1xf32>
    %42 = vector.broadcast %41 : vector<8x1xf32> to vector<8x15xf32>
    %43 = vector.shape_cast %10 : vector<8x1xf32> to vector<8x1xf32>
    %44 = vector.broadcast %43 : vector<8x1xf32> to vector<8x15xf32>
    %45 = arith.select %35, %42, %44 : vector<8x15xi1>, vector<8x15xf32>
    %46 = arith.subf %0, %40 : vector<8x15xf32>
    %47 = tpu.reciprocal %45 : vector<8x15xf32> -> vector<8x15xf32>
    %48 = arith.mulf %46, %47 : vector<8x15xf32>
    %c0_8 = arith.constant 0 : index
    %c0_9 = arith.constant 0 : index
    %49 = vector.load %arg2[%c0_8, %c0_9] : memref<15x16xf32, #tpu.memory_space<vmem>>, vector<15x16xf32>
    %cst_10 = arith.constant dense<0.000000e+00> : vector<8x16xf32>
    %50 = tpu.matmul %48, %49, %cst_10 {dimension_numbers = #tpu.dot_dimension_numbers<[1], [0], [0], [1], [0, 0, 1, 1], [], []>} : vector<8x15xf32>, vector<15x16xf32>, vector<8x16xf32> -> vector<8x16xf32>
    %c0_11 = arith.constant 0 : index
    %c0_12 = arith.constant 0 : index
    %51 = vector.load %arg3[%c0_11, %c0_12] : memref<1x16xf32, #tpu.memory_space<vmem>>, vector<1x16xf32>
    %52 = vector.broadcast %51 : vector<1x16xf32> to vector<8x16xf32>
    %53 = arith.addf %50, %52 : vector<8x16xf32>
    %cst_13 = arith.constant 0.000000e+00 : f32
    %54 = vector.broadcast %cst_13 : f32 to vector<8x16xf32>
    %55 = arith.cmpf ogt, %53, %54 : vector<8x16xf32>
    %cst_14 = arith.constant 0.00999999977 : f32
    %56 = vector.broadcast %cst_14 : f32 to vector<8x16xf32>
    %57 = arith.mulf %56, %53 : vector<8x16xf32>
    %58 = arith.select %55, %53, %57 : vector<8x16xi1>, vector<8x16xf32>
    %c0_15 = arith.constant 0 : index
    %c0_16 = arith.constant 0 : index
    %59 = vector.load %arg4[%c0_15, %c0_16] : memref<16x32xf32, #tpu.memory_space<vmem>>, vector<16x32xf32>
    %cst_17 = arith.constant dense<0.000000e+00> : vector<8x32xf32>
    %60 = tpu.matmul %58, %59, %cst_17 {dimension_numbers = #tpu.dot_dimension_numbers<[1], [0], [0], [1], [0, 0, 1, 1], [], []>} : vector<8x16xf32>, vector<16x32xf32>, vector<8x32xf32> -> vector<8x32xf32>
    %c0_18 = arith.constant 0 : index
    %c0_19 = arith.constant 0 : index
    %61 = vector.load %arg5[%c0_18, %c0_19] : memref<1x32xf32, #tpu.memory_space<vmem>>, vector<1x32xf32>
    %62 = vector.broadcast %61 : vector<1x32xf32> to vector<8x32xf32>
    %63 = arith.addf %60, %62 : vector<8x32xf32>
    %cst_20 = arith.constant 0.000000e+00 : f32
    %64 = vector.broadcast %cst_20 : f32 to vector<8x32xf32>
    %65 = arith.cmpf ogt, %63, %64 : vector<8x32xf32>
    %cst_21 = arith.constant 0.00999999977 : f32
    %66 = vector.broadcast %cst_21 : f32 to vector<8x32xf32>
    %67 = arith.mulf %66, %63 : vector<8x32xf32>
    %68 = arith.select %65, %63, %67 : vector<8x32xi1>, vector<8x32xf32>
    %c0_22 = arith.constant 0 : index
    %c0_23 = arith.constant 0 : index
    %69 = vector.load %arg6[%c0_22, %c0_23] : memref<32x13xf32, #tpu.memory_space<vmem>>, vector<32x13xf32>
    %cst_24 = arith.constant dense<0.000000e+00> : vector<8x13xf32>
    %70 = tpu.matmul %68, %69, %cst_24 {dimension_numbers = #tpu.dot_dimension_numbers<[1], [0], [0], [1], [0, 0, 1, 1], [], []>} : vector<8x32xf32>, vector<32x13xf32>, vector<8x13xf32> -> vector<8x13xf32>
    %c0_25 = arith.constant 0 : index
    %c0_26 = arith.constant 0 : index
    %71 = vector.load %arg7[%c0_25, %c0_26] : memref<1x13xf32, #tpu.memory_space<vmem>>, vector<1x13xf32>
    %72 = vector.broadcast %71 : vector<1x13xf32> to vector<8x13xf32>
    %73 = arith.addf %70, %72 : vector<8x13xf32>
    %74 = tpu.iota {dimensions = array<i32: 1>} : vector<8x13xi32>
    %c12_i32 = arith.constant 12 : i32
    %75 = vector.broadcast %c12_i32 : i32 to vector<8x13xi32>
    %76 = arith.cmpi eq, %74, %75 : vector<8x13xi32>
    %77 = math.tanh %73 : vector<8x13xf32>
    %cst_27 = arith.constant 3.14159274 : f32
    %78 = vector.broadcast %cst_27 : f32 to vector<8x13xf32>
    %79 = arith.mulf %77, %78 : vector<8x13xf32>
    %80 = arith.select %76, %79, %73 : vector<8x13xi1>, vector<8x13xf32>
    %c0_28 = arith.constant 0 : index
    %c0_29 = arith.constant 0 : index
    %81 = vector.load %arg8[%c0_28, %c0_29] : memref<8x13xf32, #tpu.memory_space<vmem>>, vector<8x13xf32>
    tpu.vector_store %arg8[%c0_28, %c0_29], %80 {strides = array<i32>} : memref<8x13xf32, #tpu.memory_space<vmem>>, vector<8x13xf32>,
    return
  }
  func.func @transform_0(%arg0: i32) -> (i32, i32) {
    %c0_i32 = arith.constant 0 : i32
    %c0_i32_0 = arith.constant 0 : i32
    return %arg0, %c0_i32 : i32, i32
  }
  func.func @transform_1(%arg0: i32) -> (i32, i32) {
    %c0_i32 = arith.constant 0 : i32
    %c0_i32_0 = arith.constant 0 : i32
    %c0_i32_1 = arith.constant 0 : i32
    return %c0_i32, %c0_i32_0 : i32, i32
  }
  func.func @transform_2(%arg0: i32) -> (i32, i32) {
    %c0_i32 = arith.constant 0 : i32
    %c0_i32_0 = arith.constant 0 : i32
    %c0_i32_1 = arith.constant 0 : i32
    return %c0_i32, %c0_i32_0 : i32, i32
  }
  func.func @transform_3(%arg0: i32) -> (i32, i32) {
    %c0_i32 = arith.constant 0 : i32
    %c0_i32_0 = arith.constant 0 : i32
    %c0_i32_1 = arith.constant 0 : i32
    return %c0_i32, %c0_i32_0 : i32, i32
  }
  func.func @transform_4(%arg0: i32) -> (i32, i32) {
    %c0_i32 = arith.constant 0 : i32
    %c0_i32_0 = arith.constant 0 : i32
    %c0_i32_1 = arith.constant 0 : i32
    return %c0_i32, %c0_i32_0 : i32, i32
  }
  func.func @transform_5(%arg0: i32) -> (i32, i32) {
    %c0_i32 = arith.constant 0 : i32
    %c0_i32_0 = arith.constant 0 : i32
    %c0_i32_1 = arith.constant 0 : i32
    return %c0_i32, %c0_i32_0 : i32, i32
  }
  func.func @transform_6(%arg0: i32) -> (i32, i32) {
    %c0_i32 = arith.constant 0 : i32
    %c0_i32_0 = arith.constant 0 : i32
    %c0_i32_1 = arith.constant 0 : i32
    return %c0_i32, %c0_i32_0 : i32, i32
  }
  func.func @transform_7(%arg0: i32) -> (i32, i32) {
    %c0_i32 = arith.constant 0 : i32
    %c0_i32_0 = arith.constant 0 : i32
    return %arg0, %c0_i32 : i32, i32
  }
}

</mosaic_0001>

<llo_original>
// kernel: posenet_forward.1
$region0: #{posenet_forward.1}
  #allocation0 [shape = 'u32[]', space=smem, size = 0x4, offset = 0x4, fixed_abs, tag = 'smem constant byte address 0x4 - core index']
  #allocation1 [shape = 'u32[144,128]{1,0:T(1,128)}', space=vmem, size = 0x12000, scoped, tag = 'internal scratch']
  %s0 = inlined_call_operand.vmem [shape: f32[8,15], index: 0, kind: input, shape index: {}]
  %s1 = inlined_call_operand.vmem [shape: f32[15,16], index: 1, kind: input, shape index: {}]
  %s2 = inlined_call_operand.vmem [shape: f32[1,16], index: 2, kind: input, shape index: {}]
  %s3 = inlined_call_operand.vmem [shape: f32[16,32], index: 3, kind: input, shape index: {}]
  %s4 = inlined_call_operand.vmem [shape: f32[1,32], index: 4, kind: input, shape index: {}]
  %s5 = inlined_call_operand.vmem [shape: f32[32,13], index: 5, kind: input, shape index: {}]
  %s6 = inlined_call_operand.vmem [shape: f32[1,13], index: 6, kind: input, shape index: {}]
  %s7 = inlined_call_operand.hbm [shape: f32[8,13], index: 7, kind: output, shape index: {}]
  %s8 = sld [smem:[#allocation0]]
  $region38: #{posenet_forward.1} parent=0
    _
  %s10 = ssub.s32 1, %s8
  %s11 = scalar_select 0, %s10, %s8
  $region1: #{posenet_forward.1} parent=0
    #allocation2 [shape = 'u8[4096]{0}', space=vmem, size = 0x1000, scoped, tag = 'output window, operand 0, single buffered']
    #allocation3 [shape = 's32[1]{0}', space=sflag, size = 0x4, scoped, tag = 'scoped memory for posenet_forward.1']
    %12 = vsyncpa [#allocation3], 0
    // Predicated region
    $region2: #{posenet_forward.1} parent=1 // pred_check
      _
    $region3: #{posenet_forward.1} parent=1 // pred_check_branch
      %14 = sbr.rel (0) target = $region5
    $region4: #{posenet_forward.1} parent=1 // pred_region
      _
    $region5: #{posenet_forward.1} parent=1 // pred_fallthru
      _
    // Predicated region
    $region6: #{posenet_forward.1} parent=1 // pred_check
      _
    $region7: #{posenet_forward.1} parent=1 // pred_check_branch
      %16 = sbr.rel (0) target = $region9
    $region8: #{posenet_forward.1} parent=1 // pred_region
      _
    $region9: #{posenet_forward.1} parent=1 // pred_fallthru
      _
    // Predicated region
    $region10: #{posenet_forward.1} parent=1 // pred_check
      _
    $region11: #{posenet_forward.1} parent=1 // pred_check_branch
      %18 = sbr.rel (0) target = $region13
    $region12: #{posenet_forward.1} parent=1 // pred_region
      _
    $region13: #{posenet_forward.1} parent=1 // pred_fallthru
      _
    // Predicated region
    $region14: #{posenet_forward.1} parent=1 // pred_check
      _
    $region15: #{posenet_forward.1} parent=1 // pred_check_branch
      %20 = sbr.rel (0) target = $region17
    $region16: #{posenet_forward.1} parent=1 // pred_region
      _
    $region17: #{posenet_forward.1} parent=1 // pred_fallthru
      _
    // Predicated region
    $region18: #{posenet_forward.1} parent=1 // pred_check
      _
    $region19: #{posenet_forward.1} parent=1 // pred_check_branch
      %22 = sbr.rel (0) target = $region21
    $region20: #{posenet_forward.1} parent=1 // pred_region
      _
    $region21: #{posenet_forward.1} parent=1 // pred_fallthru
      _
    // Predicated region
    $region22: #{posenet_forward.1} parent=1 // pred_check
      _
    $region23: #{posenet_forward.1} parent=1 // pred_check_branch
      %24 = sbr.rel (0) target = $region25
    $region24: #{posenet_forward.1} parent=1 // pred_region
      _
    $region25: #{posenet_forward.1} parent=1 // pred_fallthru
      _
    // Predicated region
    $region26: #{posenet_forward.1} parent=1 // pred_check
      _
    $region27: #{posenet_forward.1} parent=1 // pred_check_branch
      %26 = sbr.rel (0) target = $region29
    $region28: #{posenet_forward.1} parent=1 // pred_region
      _
    $region29: #{posenet_forward.1} parent=1 // pred_fallthru
      _
    %v27 = vld [vmem:[%s0] sm:$0xff]
    %29 = vrot.lane.b32.xlu0 %v27, 2
    %v30 = vpop.permute.xlu0 %29
    %v32 = vsub.f32 %v27, %v30
    %v33 = vadd.f32 %v32, 0.001
    %v34 = vadd.f32 %v27, %v30
    %v35 = vmul.f32 %v34, 0.5
    %v36 = vlaneseq
    %v37 = vand.u32 %v36, 127
    %vm38 = vcmp.lt.s32.totalorder %v37, 0
    %v39 = vsub.s32 0, %v37
    %v40 = vsel %vm38, %v39, %v37
    %v41 = vshrl.u32 %v40, 1
    %v42 = vand.u32 %v40, 1
    %v43 = vsub.s32 0, %v42
    %v44 = vsel %vm38, %v43, %v42
    %vm45 = vcmp.ne.s32.totalorder %v44, 0
    %vm46 = vcmp.lt.s32.totalorder %v44, 0
    %vm47 = vmand %vm46, %vm45
    %v48 = vadd.s32 %v44, 2
    %v49 = vsel %vm47, %v48, %v44
    %vm50 = vcmp.eq.s32.totalorder %v49, 1
    %52 = vset.pattern.permute.xlu0 2
    %53 = vperm.xlu0 %52, %v35
    %v54 = vpop.permute.xlu0 %53
    %56 = vset.pattern.permute.xlu0 3
    %57 = vperm.xlu0 %56, %v35
    %v58 = vpop.permute.xlu0 %57
    %v60 = vsel %vm50, %v54, %v58
    %62 = vset.pattern.permute.xlu0 2
    %63 = vperm.xlu0 %62, %v33
    %v64 = vpop.permute.xlu0 %63
    %66 = vset.pattern.permute.xlu0 3
    %67 = vperm.xlu0 %66, %v33
    %v68 = vpop.permute.xlu0 %67
    %v70 = vsel %vm50, %v64, %v68
    %v71 = vsub.f32 %v27, %v60
    %v72 = vrcp.pop %v70
    %v73 = vmul.f32 %v71, %v72
    %v74 = vld [vmem:[%s1] sm:$0xff]
    %v75 = vld [vmem:[%s1 + $0x8] sm:$0x7f]
    %v76 = vld [vmem:[%s2] sm:$0x1]
    %v78 = vlaneseq
    %v79 = vshrl.u32 %v78, 7
    %v80 = vsub.s32 0, %v79
    %v81 = vrot.slane %v76, %v80
    %vm83 = vcmask 121856
    %v85 = vsel %vm83, %v73, 0
    %vm87 = vcmask 1046528
    %v89 = vsel %vm87, %v75, 0
    %91 = vmatprep.subr.mxu0 0.0
    %92 = vmatpush1.msra.mxu0 %v74
    %93 = vmatprep.subr.mxu0 0.0
    %94 = vmatpush1.msra.mxu0 %v89
    %95 = vmatprep.subr.mxu0 0.0
    %96 = vmatpush1.msra.mxu0 0.0
    %97 = vmatprep.subr.mxu0 0.0
    %98 = vmatpush1.msra.mxu0 0.0
    %99 = vmatprep.subr.mxu0 0.0
    %100 = vmatpush1.msra.mxu0 0.0
    %101 = vmatprep.subr.mxu0 0.0
    %102 = vmatpush1.msra.mxu0 0.0
    %103 = vmatprep.subr.mxu0 0.0
    %104 = vmatpush1.msra.mxu0 0.0
    %105 = vmatprep.subr.mxu0 0.0
    %106 = vmatpush1.msra.mxu0 0.0
    %107 = vmatprep.subr.mxu0 0.0
    %108 = vmatpush1.msra.mxu0 0.0
    %109 = vmatprep.subr.mxu0 0.0
    %110 = vmatpush1.msra.mxu0 0.0
    %111 = vmatprep.subr.mxu0 0.0
    %112 = vmatpush1.msra.mxu0 0.0
    %113 = vmatprep.subr.mxu0 0.0
    %114 = vmatpush1.msra.mxu0 0.0
    %115 = vmatprep.subr.mxu0 0.0
    %116 = vmatpush1.msra.mxu0 0.0
    %117 = vmatprep.subr.mxu0 0.0
    %118 = vmatpush1.msra.mxu0 0.0
    %119 = vmatprep.subr.mxu0 0.0
    %120 = vmatpush1.msra.mxu0 0.0
    %121 = vmatprep.subr.mxu0 0.0
    %122 = vmatpush1.msra.mxu0 0.0
    %123 = vmatprep.subr.mxu0 0.0
    %124 = vmatpush1.msra.mxu0 0.0
    %125 = vmatprep.subr.mxu0 0.0
    %126 = vmatpush1.msra.mxu0 0.0
    %127 = vmatprep.subr.mxu0 0.0
    %128 = vmatpush1.msra.mxu0 0.0
    %129 = vmatprep.subr.mxu0 0.0
    %130 = vmatpush1.msra.mxu0 0.0
    %131 = vmatprep.subr.mxu0 0.0
    %132 = vmatpush1.msra.mxu0 0.0
    %133 = vmatprep.subr.mxu0 0.0
    %134 = vmatpush1.msra.mxu0 0.0
    %135 = vmatprep.subr.mxu0 0.0
    %136 = vmatpush1.msra.mxu0 0.0
    %137 = vmatprep.subr.mxu0 0.0
    %138 = vmatpush1.msra.mxu0 0.0
    %139 = vmatprep.subr.mxu0 0.0
    %140 = vmatpush1.msra.mxu0 0.0
    %141 = vmatprep.subr.mxu0 0.0
    %142 = vmatpush1.msra.mxu0 0.0
    %143 = vmatprep.subr.mxu0 0.0
    %144 = vmatpush1.msra.mxu0 0.0
    %145 = vmatprep.subr.mxu0 0.0
    %146 = vmatpush1.msra.mxu0 0.0
    %147 = vmatprep.subr.mxu0 0.0
    %148 = vmatpush1.msra.mxu0 0.0
    %149 = vmatprep.subr.mxu0 0.0
    %150 = vmatpush1.msra.mxu0 0.0
    %151 = vmatprep.subr.mxu0 0.0
    %152 = vmatpush1.msra.mxu0 0.0
    %153 = vmatprep.subr.mxu0 0.0
    %154 = vmatpush1.msra.mxu0 0.0
    %155 = vmatprep.mubr.f32.mxu0 0.0
    %156 = vmatmul.mubr.f32.gmra.mrb[0].mxu0 %v85
    %v157 = vpop.f32.mrb[0].mxu0
    %v158 = vadd.f32 %v81, %v157
    %v159 = vpop.f32.mrb[0].mxu0
    %160 = vdwg.mxu0
    %vm161 = vcmp.gt.f32.partialorder %v158, 0.0
    %v162 = vmul.f32 %v158, 0.01
    %v163 = vsel %vm161, %v158, %v162
    %v164 = vld [vmem:[%s3] sm:$0xff]
    %v165 = vld [vmem:[%s3 + $0x8] sm:$0xff]
    %v166 = vld [vmem:[%s4] sm:$0x1]
    %v168 = vlaneseq
    %v169 = vshrl.u32 %v168, 7
    %v170 = vsub.s32 0, %v169
    %v171 = vrot.slane %v166, %v170
    %vm173 = vcmask 130048
    %v175 = vsel %vm173, %v163, 0
    %177 = vmatprep.subr.mxu0 0.0
    %178 = vmatpush1.msra.mxu0 %v164
    %179 = vmatprep.subr.mxu0 0.0
    %180 = vmatpush1.msra.mxu0 %v165
    %181 = vmatprep.subr.mxu0 0.0
    %182 = vmatpush1.msra.mxu0 0.0
    %183 = vmatprep.subr.mxu0 0.0
    %184 = vmatpush1.msra.mxu0 0.0
    %185 = vmatprep.subr.mxu0 0.0
    %186 = vmatpush1.msra.mxu0 0.0
    %187 = vmatprep.subr.mxu0 0.0
    %188 = vmatpush1.msra.mxu0 0.0
    %189 = vmatprep.subr.mxu0 0.0
    %190 = vmatpush1.msra.mxu0 0.0
    %191 = vmatprep.subr.mxu0 0.0
    %192 = vmatpush1.msra.mxu0 0.0
    %193 = vmatprep.subr.mxu0 0.0
    %194 = vmatpush1.msra.mxu0 0.0
    %195 = vmatprep.subr.mxu0 0.0
    %196 = vmatpush1.msra.mxu0 0.0
    %197 = vmatprep.subr.mxu0 0.0
    %198 = vmatpush1.msra.mxu0 0.0
    %199 = vmatprep.subr.mxu0 0.0
    %200 = vmatpush1.msra.mxu0 0.0
    %201 = vmatprep.subr.mxu0 0.0
    %202 = vmatpush1.msra.mxu0 0.0
    %203 = vmatprep.subr.mxu0 0.0
    %204 = vmatpush1.msra.mxu0 0.0
    %205 = vmatprep.subr.mxu0 0.0
    %206 = vmatpush1.msra.mxu0 0.0
    %207 = vmatprep.subr.mxu0 0.0
    %208 = vmatpush1.msra.mxu0 0.0
    %209 = vmatprep.subr.mxu0 0.0
    %210 = vmatpush1.msra.mxu0 0.0
    %211 = vmatprep.subr.mxu0 0.0
    %212 = vmatpush1.msra.mxu0 0.0
    %213 = vmatprep.subr.mxu0 0.0
    %214 = vmatpush1.msra.mxu0 0.0
    %215 = vmatprep.subr.mxu0 0.0
    %216 = vmatpush1.msra.mxu0 0.0
    %217 = vmatprep.subr.mxu0 0.0
    %218 = vmatpush1.msra.mxu0 0.0
    %219 = vmatprep.subr.mxu0 0.0
    %220 = vmatpush1.msra.mxu0 0.0
    %221 = vmatprep.subr.mxu0 0.0
    %222 = vmatpush1.msra.mxu0 0.0
    %223 = vmatprep.subr.mxu0 0.0
    %224 = vmatpush1.msra.mxu0 0.0
    %225 = vmatprep.subr.mxu0 0.0
    %226 = vmatpush1.msra.mxu0 0.0
    %227 = vmatprep.subr.mxu0 0.0
    %228 = vmatpush1.msra.mxu0 0.0
    %229 = vmatprep.subr.mxu0 0.0
    %230 = vmatpush1.msra.mxu0 0.0
    %231 = vmatprep.subr.mxu0 0.0
    %232 = vmatpush1.msra.mxu0 0.0
    %233 = vmatprep.subr.mxu0 0.0
    %234 = vmatpush1.msra.mxu0 0.0
    %235 = vmatprep.subr.mxu0 0.0
    %236 = vmatpush1.msra.mxu0 0.0
    %237 = vmatprep.subr.mxu0 0.0
    %238 = vmatpush1.msra.mxu0 0.0
    %239 = vmatprep.subr.mxu0 0.0
    %240 = vmatpush1.msra.mxu0 0.0
    %241 = vmatprep.mubr.f32.mxu0 0.0
    %242 = vmatmul.mubr.f32.gmra.mrb[0].mxu0 %v175
    %v243 = vpop.f32.mrb[0].mxu0
    %v244 = vadd.f32 %v171, %v243
    %v245 = vpop.f32.mrb[0].mxu0
    %246 = vdwg.mxu0
    %vm247 = vcmp.gt.f32.partialorder %v244, 0.0
    %v248 = vmul.f32 %v244, 0.01
    %v249 = vsel %vm247, %v244, %v248
    %v250 = vld [vmem:[%s5] sm:$0xff]
    %v251 = vld [vmem:[%s5 + $0x8] sm:$0xff]
    %v252 = vld [vmem:[%s5 + $0x10] sm:$0xff]
    %v253 = vld [vmem:[%s5 + $0x18] sm:$0xff]
    %v254 = vld [vmem:[%s6] sm:$0x1]
    %v256 = vlaneseq
    %v257 = vshrl.u32 %v256, 7
    %v258 = vsub.s32 0, %v257
    %v259 = vrot.slane %v254, %v258
    %vm261 = vcmask 261120
    %v263 = vsel %vm261, %v249, 0
    %265 = vmatprep.subr.mxu0 0.0
    %266 = vmatpush1.msra.mxu0 %v250
    %267 = vmatprep.subr.mxu0 0.0
    %268 = vmatpush1.msra.mxu0 %v251
    %269 = vmatprep.subr.mxu0 0.0
    %270 = vmatpush1.msra.mxu0 %v252
    %271 = vmatprep.subr.mxu0 0.0
    %272 = vmatpush1.msra.mxu0 %v253
    %273 = vmatprep.subr.mxu0 0.0
    %274 = vmatpush1.msra.mxu0 0.0
    %275 = vmatprep.subr.mxu0 0.0
    %276 = vmatpush1.msra.mxu0 0.0
    %277 = vmatprep.subr.mxu0 0.0
    %278 = vmatpush1.msra.mxu0 0.0
    %279 = vmatprep.subr.mxu0 0.0
    %280 = vmatpush1.msra.mxu0 0.0
    %281 = vmatprep.subr.mxu0 0.0
    %282 = vmatpush1.msra.mxu0 0.0
    %283 = vmatprep.subr.mxu0 0.0
    %284 = vmatpush1.msra.mxu0 0.0
    %285 = vmatprep.subr.mxu0 0.0
    %286 = vmatpush1.msra.mxu0 0.0
    %287 = vmatprep.subr.mxu0 0.0
    %288 = vmatpush1.msra.mxu0 0.0
    %289 = vmatprep.subr.mxu0 0.0
    %290 = vmatpush1.msra.mxu0 0.0
    %291 = vmatprep.subr.mxu0 0.0
    %292 = vmatpush1.msra.mxu0 0.0
    %293 = vmatprep.subr.mxu0 0.0
    %294 = vmatpush1.msra.mxu0 0.0
    %295 = vmatprep.subr.mxu0 0.0
    %296 = vmatpush1.msra.mxu0 0.0
    %297 = vmatprep.subr.mxu0 0.0
    %298 = vmatpush1.msra.mxu0 0.0
    %299 = vmatprep.subr.mxu0 0.0
    %300 = vmatpush1.msra.mxu0 0.0
    %301 = vmatprep.subr.mxu0 0.0
    %302 = vmatpush1.msra.mxu0 0.0
    %303 = vmatprep.subr.mxu0 0.0
    %304 = vmatpush1.msra.mxu0 0.0
    %305 = vmatprep.subr.mxu0 0.0
    %306 = vmatpush1.msra.mxu0 0.0
    %307 = vmatprep.subr.mxu0 0.0
    %308 = vmatpush1.msra.mxu0 0.0
    %309 = vmatprep.subr.mxu0 0.0
    %310 = vmatpush1.msra.mxu0 0.0
    %311 = vmatprep.subr.mxu0 0.0
    %312 = vmatpush1.msra.mxu0 0.0
    %313 = vmatprep.subr.mxu0 0.0
    %314 = vmatpush1.msra.mxu0 0.0
    %315 = vmatprep.subr.mxu0 0.0
    %316 = vmatpush1.msra.mxu0 0.0
    %317 = vmatprep.subr.mxu0 0.0
    %318 = vmatpush1.msra.mxu0 0.0
    %319 = vmatprep.subr.mxu0 0.0
    %320 = vmatpush1.msra.mxu0 0.0
    %321 = vmatprep.subr.mxu0 0.0
    %322 = vmatpush1.msra.mxu0 0.0
    %323 = vmatprep.subr.mxu0 0.0
    %324 = vmatpush1.msra.mxu0 0.0
    %325 = vmatprep.subr.mxu0 0.0
    %326 = vmatpush1.msra.mxu0 0.0
    %327 = vmatprep.subr.mxu0 0.0
    %328 = vmatpush1.msra.mxu0 0.0
    %329 = vmatprep.mubr.f32.mxu0 0.0
    %330 = vmatmul.mubr.f32.gmra.mrb[0].mxu0 %v263
    %v331 = vpop.f32.mrb[0].mxu0
    %v332 = vadd.f32 %v259, %v331
    %v333 = vpop.f32.mrb[0].mxu0
    %334 = vdwg.mxu0
    %vm335 = vcmp.eq.s32.totalorder %v37, 12
    %v336 = vtanh.pop %v332
    %v337 = vmul.f32 %v336, 3.1415927
    %v338 = vsel %vm335, %v337, %v332
    %vm339 = vcmask 105472
    %340 = vst.msk [vmem:[#allocation2] sm:$0xff] %vm339, %v338
    // Predicated region
    $region30: #{posenet_forward.1} parent=1 // pred_check
      _
    $region31: #{posenet_forward.1} parent=1 // pred_check_branch
      %342 = sbr.rel (0) target = $region33
    $region32: #{posenet_forward.1} parent=1 // pred_region
      %s344 = ssub.s32 128, 128
      %345 = vsyncadd [#allocation3], %s344
      %s347 = sshll.u32 [#allocation2], 4
      %s348 = int_to_ptr.vmem [resolvable:$true] %s347
      %350 = dma.vmem_to_hbm [thread:$0]  %s348, 128, %s7, [#allocation3]
    $region33: #{posenet_forward.1} parent=1 // pred_fallthru
      _
    // Predicated region
    $region34: #{posenet_forward.1} parent=1 // pred_check
      _
    $region35: #{posenet_forward.1} parent=1 // pred_check_branch
      %352 = sbr.rel (0) target = $region37
    $region36: #{posenet_forward.1} parent=1 // pred_region
      %353 = dma.done [#allocation3], 128
    $region37: #{posenet_forward.1} parent=1 // pred_fallthru
      _
    %354 = vsyncpa [#allocation3], 1

</llo_original>
